<compile_context>
chip_gen: v5e
topology: v5e:2x2
jax: 0.10.0
libtpu: 0.0.40
codegen_flags: <defaults>
</compile_context>

<pallas_src>
import functools

import jax
import jax.numpy as jnp
from jax.experimental import pallas as pl
from jax.experimental.pallas import tpu as pltpu


# ------------------------------- small helpers -------------------------------

def _round_up(x, m):
    return ((x + m - 1) // m) * m


def _pad_weight(w):
    """(K, N) -> (round_up(K,128), round_up(N,128)) with zero padding."""
    K, N = w.shape
    Kp, Np = _round_up(K, 128), _round_up(N, 128)
    return jnp.zeros((Kp, Np), jnp.float32).at[:K, :N].set(w)


def _stack_biases(biases):
    """List of (1, N_i) biases -> single (L, maxNp) buffer (zero padded)."""
    max_np = max(_round_up(b.shape[1], 128) for b in biases)
    out = jnp.zeros((len(biases), max_np), jnp.float32)
    for i, b in enumerate(biases):
        out = out.at[i, : b.shape[1]].set(b[0])
    return out


# ----------------------------- fused Pallas kernels --------------------------

def _fused_mlp_kernel(*refs, n_layers):
    """Whole DQN / DDQN forward for one batch tile.

    refs = (x_ref, w_0, ..., w_{L-1}, b_ref, o_ref)
    Linear -> ReLU -> ... -> Linear (ReLU fused into every layer but the last).
    """
    x_ref = refs[0]
    w_refs = refs[1:1 + n_layers]
    b_ref = refs[1 + n_layers]
    o_ref = refs[2 + n_layers]

    b_all = b_ref[...]                      # (L, maxNp), single VMEM load
    h = x_ref[...]
    for i in range(n_layers):
        w = w_refs[i][...]                  # (Kp_i, Np_i), lane-aligned
        np_i = w.shape[1]
        y = jnp.dot(h, w, preferred_element_type=jnp.float32)
        y = y + b_all[i:i + 1, :np_i]       # (1, Np_i) broadcast over rows
        if i < n_layers - 1:
            y = jnp.maximum(y, 0.0)
        h = y
    o_ref[...] = h.astype(o_ref.dtype)


def _fused_duel_kernel(*refs, n_trunk, batch, out_dim):
    """Whole Duel-DQN forward: shared trunk once, two heads, dueling combine.

    refs = (x_ref, w_trunk_0, ..., w_trunk_{T-1}, w_val, w_adv, b_ref, o_ref)
    bias rows: 0..T-1 trunk, T value head, T+1 advantage head.
    """
    x_ref = refs[0]
    trunk_w = refs[1:1 + n_trunk]
    wv_ref = refs[1 + n_trunk]
    wa_ref = refs[2 + n_trunk]
    b_ref = refs[3 + n_trunk]
    o_ref = refs[4 + n_trunk]

    b_all = b_ref[...]

    # Shared trunk (each trunk Linear is followed by ReLU in the PyTorch model).
    h = x_ref[...]
    for i in range(n_trunk):
        w = trunk_w[i][...]
        np_i = w.shape[1]
        h = jnp.maximum(
            jnp.dot(h, w, preferred_element_type=jnp.float32)
            + b_all[i:i + 1, :np_i],
            0.0,
        )

    # Heads.
    wv = wv_ref[...]
    wa = wa_ref[...]
    v = jnp.dot(h, wv, preferred_element_type=jnp.float32) \
        + b_all[n_trunk:n_trunk + 1, :wv.shape[1]]
    a = jnp.dot(h, wa, preferred_element_type=jnp.float32) \
        + b_all[n_trunk + 1:n_trunk + 2, :wa.shape[1]]

    # PyTorch: x = v + (a - a.mean()), mean over the WHOLE advantage tensor
    # (batch included).  Padded rows/cols must not contribute to the mean.
    rows = jax.lax.broadcasted_iota(jnp.int32, a.shape, 0)
    cols = jax.lax.broadcasted_iota(jnp.int32, a.shape, 1)
    valid = (rows < batch) & (cols < out_dim)
    mean = jnp.sum(jnp.where(valid, a, 0.0)) * (1.0 / (batch * out_dim))

    v_col = v[:, 0:1]                       # real value column, (Mp, 1)
    o_ref[...] = (v_col + (a - mean)).astype(o_ref.dtype)


# ------------------------------ Qnet in Pallas --------------------------------

def _init_linear(key, fan_in, fan_out):
    """torch.nn.Linear-style init U(-1/sqrt(in), 1/sqrt(in)); weight stored
    as (in, out) so the kernel computes x @ W directly."""
    kw, kb = jax.random.split(key)
    bound = 1.0 / jnp.sqrt(jnp.float32(fan_in))
    w = jax.random.uniform(kw, (fan_in, fan_out), jnp.float32, -bound, bound)
    b = jax.random.uniform(kb, (1, fan_out), jnp.float32, -bound, bound)
    return w, b


def _build_trunk_params(key, input_size, hidden_size):
    sizes = [input_size] + list(hidden_size)
    params = []
    for i in range(len(sizes) - 1):
        key, sub = jax.random.split(key)
        params.append(_init_linear(sub, sizes[i], sizes[i + 1]))
    return params, key


class QnetPallas:
    def __init__(self, input_size, output_size, hidden_size, model_name, key):
        self.model_name = model_name
        self.input_size = input_size
        self.output_size = output_size

        if model_name in ("DQN", "DDQN"):
            trunk, key = _build_trunk_params(key, input_size, hidden_size)
            key, sub = jax.random.split(key)
            out_layer = _init_linear(sub, hidden_size[-1], output_size)
            self.main_params = trunk + [out_layer]          # unpadded (for ref)
            self.pad_weights = [_pad_weight(w) for w, _ in self.main_params]
            self.pad_biases = _stack_biases([b for _, b in self.main_params])
        elif model_name == "Duel DQN":
            # PyTorch deep-copies the already-initialized trunk: both streams
            # share identical trunk weights, so the trunk is computed once.
            trunk, key = _build_trunk_params(key, input_size, hidden_size)
            key, kv = jax.random.split(key)
            key, ka = jax.random.split(key)
            val_head = _init_linear(kv, hidden_size[-1], 1)
            adv_head = _init_linear(ka, hidden_size[-1], output_size)
            self.trunk_params = trunk
            self.val_head = val_head
            self.adv_head = adv_head
            # kept only for the pure-JAX reference
            self.value_params = trunk + [val_head]
            self.adv_params = trunk + [adv_head]
            self.trunk_pw = [_pad_weight(w) for w, _ in trunk]
            self.wv_p = _pad_weight(val_head[0])
            self.wa_p = _pad_weight(adv_head[0])
            self.pad_biases = _stack_biases(
                [b for _, b in trunk] + [val_head[1], adv_head[1]])
        else:
            raise ValueError(f"unknown model name: {model_name}")

    # ------------------------------ DQN / DDQN -------------------------------
    def _dqn_forward(self, x):
        B, F = x.shape
        Kp0 = self.pad_weights[0].shape[0]
        Np_out = self.pad_weights[-1].shape[1]
        n_layers = len(self.pad_weights)

        # Pad batch to a sublane multiple; tile it for large batches so the
        # pipeline prefetches the next M-tile and VMEM stays bounded.
        Mp = _round_up(max(B, 1), 8)
        TM = Mp if Mp <= 512 else 512
        Mp = _round_up(Mp, TM)
        xp = jnp.zeros((Mp, Kp0), jnp.float32).at[:B, :F].set(x)

        in_specs = [pl.BlockSpec((TM, Kp0), lambda i: (i, 0))]
        for w in self.pad_weights:
            in_specs.append(pl.BlockSpec(w.shape, lambda i: (0, 0)))
        in_specs.append(pl.BlockSpec(self.pad_biases.shape, lambda i: (0, 0)))

        out = pl.pallas_call(
            functools.partial(_fused_mlp_kernel, n_layers=n_layers),
            out_shape=jax.ShapeDtypeStruct((Mp, Np_out), jnp.float32),
            grid=(Mp // TM,),
            in_specs=in_specs,
            out_specs=pl.BlockSpec((TM, Np_out), lambda i: (i, 0)),
            compiler_params=pltpu.CompilerParams(
                dimension_semantics=("parallel",)),
        )(xp, *self.pad_weights, self.pad_biases)
        return out[:B, :self.output_size]

    # -------------------------------- Duel DQN -------------------------------
    def _duel_forward(self, x):
        B, F = x.shape
        Kp0 = self.trunk_pw[0].shape[0]
        Np_a = self.wa_p.shape[1]
        n_trunk = len(self.trunk_pw)

        # The dueling mean is global over (batch, actions), so keep the whole
        # (small, padded) batch in one block; padded rows are masked in-kernel.
        Mp = _round_up(max(B, 1), 8)
        xp = jnp.zeros((Mp, Kp0), jnp.float32).at[:B, :F].set(x)

        in_specs = [pl.BlockSpec((Mp, Kp0), lambda i: (0, 0))]
        for w in self.trunk_pw:
            in_specs.append(pl.BlockSpec(w.shape, lambda i: (0, 0)))
        in_specs.append(pl.BlockSpec(self.wv_p.shape, lambda i: (0, 0)))
        in_specs.append(pl.BlockSpec(self.wa_p.shape, lambda i: (0, 0)))
        in_specs.append(pl.BlockSpec(self.pad_biases.shape, lambda i: (0, 0)))

        out = pl.pallas_call(
            functools.partial(_fused_duel_kernel, n_trunk=n_trunk,
                              batch=B, out_dim=self.output_size),
            out_shape=jax.ShapeDtypeStruct((Mp, Np_a), jnp.float32),
            grid=(1,),
            in_specs=in_specs,
            out_specs=pl.BlockSpec((Mp, Np_a), lambda i: (0, 0)),
            compiler_params=pltpu.CompilerParams(
                dimension_semantics=("arbitrary",)),
        )(xp, *self.trunk_pw, self.wv_p, self.wa_p, self.pad_biases)
        return out[:B, :self.output_size]

    def __call__(self, x):
        if self.model_name in ("DQN", "DDQN"):
            return self._dqn_forward(x)
        return self._duel_forward(x)


# --------------------------------- reference ----------------------------------

def _ref_forward(net: QnetPallas, x):
    def seq(params, h):
        n = len(params)
        for i, (w, b) in enumerate(params):
            h = h @ w + b[0]
            if i < n - 1:
                h = jnp.maximum(h, 0.0)
        return h

    if net.model_name in ("DQN", "DDQN"):
        return seq(net.main_params, x)
    v = seq(net.value_params, x)
    a = seq(net.adv_params, x)
    return v + (a - jnp.mean(a))


# ----------------------------------- main --------------------------------------

if __name__ == "__main__":
    key = jax.random.PRNGKey(0)

    batch = 2
    input_size = 16
    hidden_size = [32, 32]
    output_size = 8

    key, kx = jax.random.split(key)
    x = jax.random.normal(kx, (batch, input_size), jnp.float32)

    ok = True
    for model_name in ("DQN", "Duel DQN"):
        key, knet = jax.random.split(key)
        net = QnetPallas(input_size, output_size, hidden_size, model_name, knet)
        out = net(x)
        out = jax.block_until_ready(out)
        ref = _ref_forward(net, x)
        assert out.shape == (batch, output_size), out.shape
        if not jnp.allclose(out, ref, atol=1e-4, rtol=1e-4):
            ok = False

    if ok:
        print("KERNEL_OK")
</pallas_src>

<mosaic_0001>
module attributes {stable_mosaic.version = 11 : i64} {
  func.func @_fused_mlp_kernel(%arg0: i32, %arg1: memref<8x128xf32, #tpu.memory_space<vmem>>, %arg2: memref<128x128xf32, #tpu.memory_space<vmem>>, %arg3: memref<128x128xf32, #tpu.memory_space<vmem>>, %arg4: memref<128x128xf32, #tpu.memory_space<vmem>>, %arg5: memref<3x128xf32, #tpu.memory_space<vmem>>, %arg6: memref<8x128xf32, #tpu.memory_space<vmem>>) attributes {dimension_semantics = [#tpu.dimension_semantics<parallel>], iteration_bounds = array<i64: 1>, scalar_prefetch = 0 : i64, scratch_operands = 0 : i64, tpu.core_type = #tpu.core_type<tc>, window_params = [{transform_indices = @transform_0, window_bounds = array<i64: 8, 128>}, {pipeline_mode = #tpu.pipeline_mode<synchronous>, transform_indices = @transform_1, window_bounds = array<i64: 128, 128>}, {pipeline_mode = #tpu.pipeline_mode<synchronous>, transform_indices = @transform_2, window_bounds = array<i64: 128, 128>}, {pipeline_mode = #tpu.pipeline_mode<synchronous>, transform_indices = @transform_3, window_bounds = array<i64: 128, 128>}, {pipeline_mode = #tpu.pipeline_mode<synchronous>, transform_indices = @transform_4, window_bounds = array<i64: 3, 128>}, {transform_indices = @transform_5, window_bounds = array<i64: 8, 128>}]} {
    %c0 = arith.constant 0 : index
    %c0_0 = arith.constant 0 : index
    %0 = vector.load %arg5[%c0, %c0_0] : memref<3x128xf32, #tpu.memory_space<vmem>>, vector<3x128xf32>
    %c0_1 = arith.constant 0 : index
    %c0_2 = arith.constant 0 : index
    %1 = vector.load %arg1[%c0_1, %c0_2] : memref<8x128xf32, #tpu.memory_space<vmem>>, vector<8x128xf32>
    %c0_3 = arith.constant 0 : index
    %c0_4 = arith.constant 0 : index
    %2 = vector.load %arg2[%c0_3, %c0_4] : memref<128x128xf32, #tpu.memory_space<vmem>>, vector<128x128xf32>
    %cst = arith.constant dense<0.000000e+00> : vector<8x128xf32>
    %3 = tpu.matmul %1, %2, %cst {dimension_numbers = #tpu.dot_dimension_numbers<[1], [0], [0], [1], [0, 0, 1, 1], [], []>} : vector<8x128xf32>, vector<128x128xf32>, vector<8x128xf32> -> vector<8x128xf32>
    %4 = vector.extract_strided_slice %0 {offsets = [0, 0], sizes = [1, 128], strides = [1, 1]} : vector<3x128xf32> to vector<1x128xf32>
    %5 = vector.broadcast %4 : vector<1x128xf32> to vector<8x128xf32>
    %6 = arith.addf %3, %5 : vector<8x128xf32>
    %cst_5 = arith.constant 0.000000e+00 : f32
    %7 = vector.broadcast %cst_5 : f32 to vector<8x128xf32>
    %8 = arith.maximumf %6, %7 : vector<8x128xf32>
    %c0_6 = arith.constant 0 : index
    %c0_7 = arith.constant 0 : index
    %9 = vector.load %arg3[%c0_6, %c0_7] : memref<128x128xf32, #tpu.memory_space<vmem>>, vector<128x128xf32>
    %cst_8 = arith.constant dense<0.000000e+00> : vector<8x128xf32>
    %10 = tpu.matmul %8, %9, %cst_8 {dimension_numbers = #tpu.dot_dimension_numbers<[1], [0], [0], [1], [0, 0, 1, 1], [], []>} : vector<8x128xf32>, vector<128x128xf32>, vector<8x128xf32> -> vector<8x128xf32>
    %11 = vector.extract_strided_slice %0 {offsets = [1, 0], sizes = [1, 128], strides = [1, 1]} : vector<3x128xf32> to vector<1x128xf32>
    %12 = vector.broadcast %11 : vector<1x128xf32> to vector<8x128xf32>
    %13 = arith.addf %10, %12 : vector<8x128xf32>
    %cst_9 = arith.constant 0.000000e+00 : f32
    %14 = vector.broadcast %cst_9 : f32 to vector<8x128xf32>
    %15 = arith.maximumf %13, %14 : vector<8x128xf32>
    %c0_10 = arith.constant 0 : index
    %c0_11 = arith.constant 0 : index
    %16 = vector.load %arg4[%c0_10, %c0_11] : memref<128x128xf32, #tpu.memory_space<vmem>>, vector<128x128xf32>
    %cst_12 = arith.constant dense<0.000000e+00> : vector<8x128xf32>
    %17 = tpu.matmul %15, %16, %cst_12 {dimension_numbers = #tpu.dot_dimension_numbers<[1], [0], [0], [1], [0, 0, 1, 1], [], []>} : vector<8x128xf32>, vector<128x128xf32>, vector<8x128xf32> -> vector<8x128xf32>
    %18 = vector.extract_strided_slice %0 {offsets = [2, 0], sizes = [1, 128], strides = [1, 1]} : vector<3x128xf32> to vector<1x128xf32>
    %19 = vector.broadcast %18 : vector<1x128xf32> to vector<8x128xf32>
    %20 = arith.addf %17, %19 : vector<8x128xf32>
    %c0_13 = arith.constant 0 : index
    %c0_14 = arith.constant 0 : index
    %21 = vector.load %arg6[%c0_13, %c0_14] : memref<8x128xf32, #tpu.memory_space<vmem>>, vector<8x128xf32>
    tpu.vector_store %arg6[%c0_13, %c0_14], %20 {strides = array<i32>} : memref<8x128xf32, #tpu.memory_space<vmem>>, vector<8x128xf32>,
    return
  }
  func.func @transform_0(%arg0: i32) -> (i32, i32) {
    %c0_i32 = arith.constant 0 : i32
    %c0_i32_0 = arith.constant 0 : i32
    return %arg0, %c0_i32 : i32, i32
  }
  func.func @transform_1(%arg0: i32) -> (i32, i32) {
    %c0_i32 = arith.constant 0 : i32
    %c0_i32_0 = arith.constant 0 : i32
    %c0_i32_1 = arith.constant 0 : i32
    return %c0_i32, %c0_i32_0 : i32, i32
  }
  func.func @transform_2(%arg0: i32) -> (i32, i32) {
    %c0_i32 = arith.constant 0 : i32
    %c0_i32_0 = arith.constant 0 : i32
    %c0_i32_1 = arith.constant 0 : i32
    return %c0_i32, %c0_i32_0 : i32, i32
  }
  func.func @transform_3(%arg0: i32) -> (i32, i32) {
    %c0_i32 = arith.constant 0 : i32
    %c0_i32_0 = arith.constant 0 : i32
    %c0_i32_1 = arith.constant 0 : i32
    return %c0_i32, %c0_i32_0 : i32, i32
  }
  func.func @transform_4(%arg0: i32) -> (i32, i32) {
    %c0_i32 = arith.constant 0 : i32
    %c0_i32_0 = arith.constant 0 : i32
    %c0_i32_1 = arith.constant 0 : i32
    return %c0_i32, %c0_i32_0 : i32, i32
  }
  func.func @transform_5(%arg0: i32) -> (i32, i32) {
    %c0_i32 = arith.constant 0 : i32
    %c0_i32_0 = arith.constant 0 : i32
    return %arg0, %c0_i32 : i32, i32
  }
}

</mosaic_0001>

<llo_original>
// kernel: tpu_custom_call.1
$region0: #{tpu_custom_call.1}
  #allocation0 [shape = 'u32[]', space=smem, size = 0x4, offset = 0x4, fixed_abs, tag = 'smem constant byte address 0x4 - core index']
  #allocation1 [shape = 'u32[72,128]{1,0:T(1,128)}', space=vmem, size = 0x9000, scoped, tag = 'internal scratch']
  %s0 = inlined_call_operand.hbm [shape: f32[8,128], index: 0, kind: input, shape index: {}]
  %s1 = inlined_call_operand.hbm [shape: f32[128,128], index: 1, kind: input, shape index: {}]
  %s2 = inlined_call_operand.hbm [shape: f32[128,128], index: 2, kind: input, shape index: {}]
  %s3 = inlined_call_operand.hbm [shape: f32[128,128], index: 3, kind: input, shape index: {}]
  %s4 = inlined_call_operand.hbm [shape: f32[3,128], index: 4, kind: input, shape index: {}]
  %s5 = inlined_call_operand.hbm [shape: f32[8,128], index: 5, kind: output, shape index: {}]
  %s6 = sld [smem:[#allocation0]]
  $region50: #{tpu_custom_call.1} parent=0
    _
  %s8 = ssub.s32 1, %s6
  %s9 = scalar_select 0, %s8, %s6
  $region1: #{tpu_custom_call.1} parent=0
    #allocation2 [shape = 'u8[4096]{0}', space=vmem, size = 0x1000, scoped, tag = 'input window, operand 0, single buffered']
    #allocation3 [shape = 's32[1]{0}', space=sflag, size = 0x4, scoped, tag = 'scoped memory for tpu_custom_call.1']
    #allocation4 [shape = 's32[1]{0}', space=sflag, size = 0x4, scoped, tag = 'scoped memory for tpu_custom_call.1']
    #allocation5 [shape = 'u8[65536]{0}', space=vmem, size = 0x10000, scoped, tag = 'input window, operand 1, single buffered']
    #allocation6 [shape = 's32[1]{0}', space=sflag, size = 0x4, scoped, tag = 'scoped memory for tpu_custom_call.1']
    #allocation7 [shape = 'u8[65536]{0}', space=vmem, size = 0x10000, scoped, tag = 'input window, operand 2, single buffered']
    #allocation8 [shape = 'u8[65536]{0}', space=vmem, size = 0x10000, scoped, tag = 'input window, operand 3, single buffered']
    #allocation9 [shape = 's32[1]{0}', space=sflag, size = 0x4, scoped, tag = 'scoped memory for tpu_custom_call.1']
    #allocation10 [shape = 'u8[2048]{0}', space=vmem, size = 0x800, scoped, tag = 'input window, operand 4, single buffered']
    #allocation11 [shape = 'u8[4096]{0}', space=vmem, size = 0x1000, scoped, tag = 'output window, operand 0, single buffered']
    %10 = vsyncpa [#allocation3], 0
    %11 = vsyncpa [#allocation6], 0
    %12 = vsyncpa [#allocation9], 0
    %13 = vsyncpa [#allocation4], 0
    // Predicated region
    $region2: #{tpu_custom_call.1} parent=1 // pred_check
      _
    $region3: #{tpu_custom_call.1} parent=1 // pred_check_branch
      %15 = sbr.rel (0) target = $region5
    $region4: #{tpu_custom_call.1} parent=1 // pred_region
      %17 = vsyncadd [#allocation3], 0
      %s19 = sshll.u32 %s0, 4
      %s20 = int_to_ptr.hbm [resolvable:$true] %s19
      %s21 = sshll.u32 [#allocation2], 4
      %s22 = int_to_ptr.vmem [resolvable:$true] %s21
      %24 = dma.hbm_to_vmem [thread:$0]  %s20, 128, %s22, [#allocation3]
    $region5: #{tpu_custom_call.1} parent=1 // pred_fallthru
      _
    // Predicated region
    $region6: #{tpu_custom_call.1} parent=1 // pred_check
      _
    $region7: #{tpu_custom_call.1} parent=1 // pred_check_branch
      %26 = sbr.rel (0) target = $region9
    $region8: #{tpu_custom_call.1} parent=1 // pred_region
      %28 = vsyncadd [#allocation6], 0
      %s29 = sshll.u32 %s1, 4
      %s30 = int_to_ptr.hbm [resolvable:$true] %s29
      %s31 = sshll.u32 [#allocation5], 4
      %s32 = int_to_ptr.vmem [resolvable:$true] %s31
      %37 = dma.hbm_to_vmem [thread:$0]  %s30, 2048, %s32, [#allocation6], 128, 128, 8
    $region9: #{tpu_custom_call.1} parent=1 // pred_fallthru
      _
    // Predicated region
    $region10: #{tpu_custom_call.1} parent=1 // pred_check
      _
    $region11: #{tpu_custom_call.1} parent=1 // pred_check_branch
      %39 = sbr.rel (0) target = $region13
    $region12: #{tpu_custom_call.1} parent=1 // pred_region
      %41 = vsyncadd [#allocation6], 0
      %s42 = sshll.u32 %s2, 4
      %s43 = int_to_ptr.hbm [resolvable:$true] %s42
      %s44 = sshll.u32 [#allocation7], 4
      %s45 = int_to_ptr.vmem [resolvable:$true] %s44
      %50 = dma.hbm_to_vmem [thread:$0]  %s43, 2048, %s45, [#allocation6], 128, 128, 8
    $region13: #{tpu_custom_call.1} parent=1 // pred_fallthru
      _
    // Predicated region
    $region14: #{tpu_custom_call.1} parent=1 // pred_check
      _
    $region15: #{tpu_custom_call.1} parent=1 // pred_check_branch
      %52 = sbr.rel (0) target = $region17
    $region16: #{tpu_custom_call.1} parent=1 // pred_region
      %54 = vsyncadd [#allocation9], 0
      %s55 = sshll.u32 %s3, 4
      %s56 = int_to_ptr.hbm [resolvable:$true] %s55
      %s57 = sshll.u32 [#allocation8], 4
      %s58 = int_to_ptr.vmem [resolvable:$true] %s57
      %63 = dma.hbm_to_vmem [thread:$0]  %s56, 2048, %s58, [#allocation9], 128, 128, 8
    $region17: #{tpu_custom_call.1} parent=1 // pred_fallthru
      _
    // Predicated region
    $region18: #{tpu_custom_call.1} parent=1 // pred_check
      _
    $region19: #{tpu_custom_call.1} parent=1 // pred_check_branch
      %65 = sbr.rel (0) target = $region21
    $region20: #{tpu_custom_call.1} parent=1 // pred_region
      %67 = vsyncadd [#allocation9], 0
      %s69 = sshll.u32 %s4, 4
      %s70 = int_to_ptr.hbm [resolvable:$true] %s69
      %s71 = sshll.u32 [#allocation10], 4
      %s72 = int_to_ptr.vmem [resolvable:$true] %s71
      %74 = dma.hbm_to_vmem [thread:$0]  %s70, 64, %s72, [#allocation9]
    $region21: #{tpu_custom_call.1} parent=1 // pred_fallthru
      _
    // Predicated region
    $region22: #{tpu_custom_call.1} parent=1 // pred_check
      _
    $region23: #{tpu_custom_call.1} parent=1 // pred_check_branch
      %76 = sbr.rel (0) target = $region25
    $region24: #{tpu_custom_call.1} parent=1 // pred_region
      %78 = dma.done [#allocation3], 128
    $region25: #{tpu_custom_call.1} parent=1 // pred_fallthru
      _
    // Predicated region
    $region26: #{tpu_custom_call.1} parent=1 // pred_check
      _
    $region27: #{tpu_custom_call.1} parent=1 // pred_check_branch
      %80 = sbr.rel (0) target = $region29
    $region28: #{tpu_custom_call.1} parent=1 // pred_region
      %82 = dma.done [#allocation6], 2048
    $region29: #{tpu_custom_call.1} parent=1 // pred_fallthru
      _
    // Predicated region
    $region30: #{tpu_custom_call.1} parent=1 // pred_check
      _
    $region31: #{tpu_custom_call.1} parent=1 // pred_check_branch
      %84 = sbr.rel (0) target = $region33
    $region32: #{tpu_custom_call.1} parent=1 // pred_region
      %86 = dma.done [#allocation6], 2048
    $region33: #{tpu_custom_call.1} parent=1 // pred_fallthru
      _
    // Predicated region
    $region34: #{tpu_custom_call.1} parent=1 // pred_check
      _
    $region35: #{tpu_custom_call.1} parent=1 // pred_check_branch
      %88 = sbr.rel (0) target = $region37
    $region36: #{tpu_custom_call.1} parent=1 // pred_region
      %90 = dma.done [#allocation9], 2048
    $region37: #{tpu_custom_call.1} parent=1 // pred_fallthru
      _
    // Predicated region
    $region38: #{tpu_custom_call.1} parent=1 // pred_check
      _
    $region39: #{tpu_custom_call.1} parent=1 // pred_check_branch
      %92 = sbr.rel (0) target = $region41
    $region40: #{tpu_custom_call.1} parent=1 // pred_region
      %94 = dma.done [#allocation9], 64
    $region41: #{tpu_custom_call.1} parent=1 // pred_fallthru
      _
    %v95 = vld [vmem:[#allocation10] sm:$0x7]
    %v96 = vld [vmem:[#allocation2] sm:$0xff]
    %v97 = vld [vmem:[#allocation5] sm:$0xff]
    %v98 = vld [vmem:[#allocation5 + $0x8] sm:$0xff]
    %v99 = vld [vmem:[#allocation5 + $0x10] sm:$0xff]
    %v100 = vld [vmem:[#allocation5 + $0x18] sm:$0xff]
    %v101 = vld [vmem:[#allocation5 + $0x20] sm:$0xff]
    %v102 = vld [vmem:[#allocation5 + $0x28] sm:$0xff]
    %v103 = vld [vmem:[#allocation5 + $0x30] sm:$0xff]
    %v104 = vld [vmem:[#allocation5 + $0x38] sm:$0xff]
    %v105 = vld [vmem:[#allocation5 + $0x40] sm:$0xff]
    %v106 = vld [vmem:[#allocation5 + $0x48] sm:$0xff]
    %v107 = vld [vmem:[#allocation5 + $0x50] sm:$0xff]
    %v108 = vld [vmem:[#allocation5 + $0x58] sm:$0xff]
    %v109 = vld [vmem:[#allocation5 + $0x60] sm:$0xff]
    %v110 = vld [vmem:[#allocation5 + $0x68] sm:$0xff]
    %v111 = vld [vmem:[#allocation5 + $0x70] sm:$0xff]
    %v112 = vld [vmem:[#allocation5 + $0x78] sm:$0xff]
    %v113 = vperm.slane %v95, 0
    %114 = vmatpush.msra.mxu0 %v112
    %115 = vmatpush.msra.mxu0 %v111
    %116 = vmatpush.msra.mxu0 %v110
    %117 = vmatpush.msra.mxu0 %v109
    %118 = vmatpush.msra.mxu0 %v108
    %119 = vmatpush.msra.mxu0 %v107
    %120 = vmatpush.msra.mxu0 %v106
    %121 = vmatpush.msra.mxu0 %v105
    %122 = vmatpush.msra.mxu0 %v104
    %123 = vmatpush.msra.mxu0 %v103
    %124 = vmatpush.msra.mxu0 %v102
    %125 = vmatpush.msra.mxu0 %v101
    %126 = vmatpush.msra.mxu0 %v100
    %127 = vmatpush.msra.mxu0 %v99
    %128 = vmatpush.msra.mxu0 %v98
    %129 = vmatpush.msra.mxu0 %v97
    %130 = vmatmul.f32.gmra.mxu0 %v96
    %v131 = vpop.f32.mrf.mxu0
    %v132 = vadd.f32 %v113, %v131
    %133 = vdwg.mxu0
    %v134 = vmax.f32 %v132, 0.0
    %v135 = vld [vmem:[#allocation7] sm:$0xff]
    %v136 = vld [vmem:[#allocation7 + $0x8] sm:$0xff]
    %v137 = vld [vmem:[#allocation7 + $0x10] sm:$0xff]
    %v138 = vld [vmem:[#allocation7 + $0x18] sm:$0xff]
    %v139 = vld [vmem:[#allocation7 + $0x20] sm:$0xff]
    %v140 = vld [vmem:[#allocation7 + $0x28] sm:$0xff]
    %v141 = vld [vmem:[#allocation7 + $0x30] sm:$0xff]
    %v142 = vld [vmem:[#allocation7 + $0x38] sm:$0xff]
    %v143 = vld [vmem:[#allocation7 + $0x40] sm:$0xff]
    %v144 = vld [vmem:[#allocation7 + $0x48] sm:$0xff]
    %v145 = vld [vmem:[#allocation7 + $0x50] sm:$0xff]
    %v146 = vld [vmem:[#allocation7 + $0x58] sm:$0xff]
    %v147 = vld [vmem:[#allocation7 + $0x60] sm:$0xff]
    %v148 = vld [vmem:[#allocation7 + $0x68] sm:$0xff]
    %v149 = vld [vmem:[#allocation7 + $0x70] sm:$0xff]
    %v150 = vld [vmem:[#allocation7 + $0x78] sm:$0xff]
    %v151 = vperm.slane %v95, 1
    %152 = vmatpush.msra.mxu0 %v150
    %153 = vmatpush.msra.mxu0 %v149
    %154 = vmatpush.msra.mxu0 %v148
    %155 = vmatpush.msra.mxu0 %v147
    %156 = vmatpush.msra.mxu0 %v146
    %157 = vmatpush.msra.mxu0 %v145
    %158 = vmatpush.msra.mxu0 %v144
    %159 = vmatpush.msra.mxu0 %v143
    %160 = vmatpush.msra.mxu0 %v142
    %161 = vmatpush.msra.mxu0 %v141
    %162 = vmatpush.msra.mxu0 %v140
    %163 = vmatpush.msra.mxu0 %v139
    %164 = vmatpush.msra.mxu0 %v138
    %165 = vmatpush.msra.mxu0 %v137
    %166 = vmatpush.msra.mxu0 %v136
    %167 = vmatpush.msra.mxu0 %v135
    %168 = vmatmul.f32.gmra.mxu0 %v134
    %v169 = vpop.f32.mrf.mxu0
    %v170 = vadd.f32 %v151, %v169
    %171 = vdwg.mxu0
    %v172 = vmax.f32 %v170, 0.0
    %v173 = vld [vmem:[#allocation8] sm:$0xff]
    %v174 = vld [vmem:[#allocation8 + $0x8] sm:$0xff]
    %v175 = vld [vmem:[#allocation8 + $0x10] sm:$0xff]
    %v176 = vld [vmem:[#allocation8 + $0x18] sm:$0xff]
    %v177 = vld [vmem:[#allocation8 + $0x20] sm:$0xff]
    %v178 = vld [vmem:[#allocation8 + $0x28] sm:$0xff]
    %v179 = vld [vmem:[#allocation8 + $0x30] sm:$0xff]
    %v180 = vld [vmem:[#allocation8 + $0x38] sm:$0xff]
    %v181 = vld [vmem:[#allocation8 + $0x40] sm:$0xff]
    %v182 = vld [vmem:[#allocation8 + $0x48] sm:$0xff]
    %v183 = vld [vmem:[#allocation8 + $0x50] sm:$0xff]
    %v184 = vld [vmem:[#allocation8 + $0x58] sm:$0xff]
    %v185 = vld [vmem:[#allocation8 + $0x60] sm:$0xff]
    %v186 = vld [vmem:[#allocation8 + $0x68] sm:$0xff]
    %v187 = vld [vmem:[#allocation8 + $0x70] sm:$0xff]
    %v188 = vld [vmem:[#allocation8 + $0x78] sm:$0xff]
    %v189 = vperm.slane %v95, 2
    %190 = vmatpush.msra.mxu0 %v188
    %191 = vmatpush.msra.mxu0 %v187
    %192 = vmatpush.msra.mxu0 %v186
    %193 = vmatpush.msra.mxu0 %v185
    %194 = vmatpush.msra.mxu0 %v184
    %195 = vmatpush.msra.mxu0 %v183
    %196 = vmatpush.msra.mxu0 %v182
    %197 = vmatpush.msra.mxu0 %v181
    %198 = vmatpush.msra.mxu0 %v180
    %199 = vmatpush.msra.mxu0 %v179
    %200 = vmatpush.msra.mxu0 %v178
    %201 = vmatpush.msra.mxu0 %v177
    %202 = vmatpush.msra.mxu0 %v176
    %203 = vmatpush.msra.mxu0 %v175
    %204 = vmatpush.msra.mxu0 %v174
    %205 = vmatpush.msra.mxu0 %v173
    %206 = vmatmul.f32.gmra.mxu0 %v172
    %v207 = vpop.f32.mrf.mxu0
    %v208 = vadd.f32 %v189, %v207
    %209 = vdwg.mxu0
    %210 = vst [vmem:[#allocation11] sm:$0xff] %v208
    // Predicated region
    $region42: #{tpu_custom_call.1} parent=1 // pred_check
      _
    $region43: #{tpu_custom_call.1} parent=1 // pred_check_branch
      %212 = sbr.rel (0) target = $region45
    $region44: #{tpu_custom_call.1} parent=1 // pred_region
      %214 = vsyncadd [#allocation4], 0
      %s216 = sshll.u32 [#allocation11], 4
      %s217 = int_to_ptr.vmem [resolvable:$true] %s216
      %s218 = sshll.u32 %s5, 4
      %s219 = int_to_ptr.hbm [resolvable:$true] %s218
      %221 = dma.vmem_to_hbm [thread:$0]  %s217, 128, %s219, [#allocation4]
    $region45: #{tpu_custom_call.1} parent=1 // pred_fallthru
      _
    // Predicated region
    $region46: #{tpu_custom_call.1} parent=1 // pred_check
      _
    $region47: #{tpu_custom_call.1} parent=1 // pred_check_branch
      %223 = sbr.rel (0) target = $region49
    $region48: #{tpu_custom_call.1} parent=1 // pred_region
      %225 = dma.done [#allocation4], 128
    $region49: #{tpu_custom_call.1} parent=1 // pred_fallthru
      _
    %226 = vsyncpa [#allocation3], 1
    %227 = vsyncpa [#allocation6], 1
    %228 = vsyncpa [#allocation9], 1
    %229 = vsyncpa [#allocation4], 1

</llo_original>
